<compile_context>
chip_gen: v6e
topology: v6e:2x2x1
jax: 0.10.0
libtpu: 0.0.40
codegen_flags: <defaults>
</compile_context>

<pallas_src>
import functools
import math

import numpy as np
import jax
import jax.numpy as jnp
from jax.experimental import pallas as pl
from jax.experimental.pallas import tpu as pltpu


def _round_up(x, m):
    return (x + m - 1) // m * m


def _anchor_kernel(const_ref, ymask_ref, o_ref, *, tile_rows):
    """out[r, l] = const[l] + (block_off + r) * ymask_scaled[l].

    const[l] already holds cx(j)+manip (x lanes) or (di+0.5)/H+manip (y lanes);
    ymask_scaled[l] is g/H on y lanes (per-output-row cy increment) and 0.0 on
    x lanes, so the body is one iota, one add, one mul, one add — all
    full-width VPU ops feeding a lane-dense store.
    """
    base = pl.program_id(0) * tile_rows
    r = jax.lax.broadcasted_iota(jnp.int32, (tile_rows, 1), 0)
    rowf = (base + r).astype(jnp.float32)                  # (TR, 1)
    # (1,L) + (TR,1)*(1,L) -> (TR,L): implicit sublane broadcast, full-width.
    o_ref[...] = const_ref[...] + rowf * ymask_ref[...]


def anchor_generator(feature_maps, sizes, ratios, anchor_type=None):
    """JAX/Pallas equivalent of AnchorGenerator.forward (multibox_prior)."""
    H, W = int(feature_maps.shape[-2]), int(feature_maps.shape[-1])
    num_sizes, num_ratios = len(sizes), len(ratios)
    bpp = num_sizes + num_ratios - 1
    Q = 4 * bpp

    # ---- compile-time parameter math (numpy; sizes/ratios are Python lists) ----
    sizes_np = np.asarray(sizes, np.float64)
    ratios_np = np.asarray(ratios, np.float64)
    w = np.concatenate([sizes_np * np.sqrt(ratios_np[0]),
                        sizes_np[0] * np.sqrt(ratios_np[1:])])
    if anchor_type == 'square':
        w = w * (H / W)
    h = np.concatenate([sizes_np / np.sqrt(ratios_np[0]),
                        sizes_np[0] / np.sqrt(ratios_np[1:])])
    manip = (np.stack([-w, -h, w, h], axis=1) / 2.0)                 # (bpp, 4)

    # ---- lane-dense layout: group g image rows per output row so L % 128 == 0 ----
    # Q is a multiple of 4, so g = 128 / gcd(W*Q, 128) <= 32 and L = g*W*Q is
    # always a multiple of 128 -> fully unmasked stores, full-lane writeback.
    g = 128 // math.gcd(W * Q, 128)
    L = g * W * Q
    n_valid = H * W * Q                  # valid flat elements (== H*W*bpp*4)
    R_needed = -(-H // g)                # ceil(H / g): output rows covering the image

    # ---- per-lane constant tables (trace-time numpy; no div/mod in-kernel) ----
    lane = np.arange(L)
    di = lane // (W * Q)                 # image row within the group of g
    rem = lane % (W * Q)
    j = rem // Q                         # image column
    qc = rem % Q
    b = qc // 4                          # box index
    c = qc % 4                           # coord: 0=x0,1=y0,2=x1,3=y1
    is_x = (c % 2) == 0
    cx = (j + 0.5) / W
    cy_off = (di + 0.5) / H
    mlane = manip[b, c]
    const_row = (np.where(is_x, cx, cy_off) + mlane).astype(np.float32).reshape(1, L)
    # ymask pre-scaled by g/H: kernel adds rowf * ymask directly (one fewer mul).
    ymask_row = (np.where(is_x, 0.0, 1.0) * (float(g) / float(H))
                 ).astype(np.float32).reshape(1, L)

    # ---- row tiling: <= 8 MiB full blocks, no ragged last block, megacore split ----
    max_block_bytes = 8 << 20
    tr_cap = max(8, (max_block_bytes // (L * 4)) // 8 * 8)
    rup = _round_up(R_needed, 8)
    if rup <= tr_cap and R_needed * L * 4 >= (2 << 20) and R_needed >= 16:
        # Fits one block but is multi-MiB: split the row axis into >=2 full
        # blocks so the ("parallel",) axis shards across v7x's 2 TensorCores.
        tile_rows = max(8, (R_needed // 2) // 8 * 8)
    else:
        tile_rows = min(tr_cap, rup)
    num_blocks = -(-R_needed // tile_rows)
    R_pad = num_blocks * tile_rows       # output padded to full blocks (no vst.msk)

    block_bytes = tile_rows * L * 4
    in_bytes = 2 * L * 4                 # the two (1, L) f32 lane tables
    # Explicit VMEM budget from the real block size: 2x-buffered output block +
    # 2x-buffered inputs + 1 MiB slack.  Stays well under v7x's 64 MiB physical
    # and v5e/v6e's 128 MiB while overriding v5e's 16 MiB default scoped limit.
    # TODO(synk): single-buffer the constant lane tables (pipeline_mode) to
    # free a little more headroom; they never change across grid steps.
    vmem_limit = int(max(2 * block_bytes + 2 * in_bytes + (1 << 20), 16 << 20))

    out2d = pl.pallas_call(
        functools.partial(_anchor_kernel, tile_rows=tile_rows),
        out_shape=jax.ShapeDtypeStruct((R_pad, L), jnp.float32),
        grid=(num_blocks,),
        in_specs=[pl.BlockSpec((1, L), lambda i: (0, 0)),
                  pl.BlockSpec((1, L), lambda i: (0, 0))],
        out_specs=pl.BlockSpec((tile_rows, L), lambda i: (i, 0)),
        compiler_params=pltpu.CompilerParams(
            dimension_semantics=("parallel",),
            vmem_limit_bytes=vmem_limit),
    )(jnp.asarray(const_row), jnp.asarray(ymask_row))

    # Row-major flat order matches the PyTorch output; any padded tail (from
    # H % g != 0 or block rounding) is sliced off before the free reshape.
    flat = out2d.reshape(-1)
    if int(flat.shape[0]) != n_valid:
        flat = flat[:n_valid]
    return flat.reshape(H * W * bpp, 4)


def _reference_numpy(H, W, sizes, ratios, anchor_type=None):
    """Pure-numpy mirror of the PyTorch multibox_prior, for verification."""
    sizes = np.asarray(sizes, np.float32)
    ratios = np.asarray(ratios, np.float32)
    bpp = len(sizes) + len(ratios) - 1
    center_h = (np.arange(H, dtype=np.float32) + 0.5) / H
    center_w = (np.arange(W, dtype=np.float32) + 0.5) / W
    shift_y, shift_x = np.meshgrid(center_h, center_w, indexing='ij')
    shift_y, shift_x = shift_y.reshape(-1), shift_x.reshape(-1)
    if anchor_type == 'square':
        w = np.concatenate([sizes * np.sqrt(ratios[0]),
                            sizes[0] * np.sqrt(ratios[1:])]) * H / W
    else:
        w = np.concatenate([sizes * np.sqrt(ratios[0]),
                            sizes[0] * np.sqrt(ratios[1:])])
    h = np.concatenate([sizes / np.sqrt(ratios[0]),
                        sizes[0] / np.sqrt(ratios[1:])])
    manip = np.tile(np.stack([-w, -h, w, h]).T, (H * W, 1)) / 2.0
    grid = np.repeat(np.stack([shift_x, shift_y, shift_x, shift_y], axis=1),
                     bpp, axis=0)
    return (grid + manip).astype(np.float32)


if __name__ == "__main__":
    key = jax.random.PRNGKey(0)
    sizes = [0.75, 0.5, 0.25]
    ratios = [1.0, 2.0, 0.5]

    # Small NCHW feature map; only H, W matter for the anchors.
    x = jax.random.normal(key, (2, 4, 16, 16), dtype=jnp.float32)
    out = jax.block_until_ready(anchor_generator(x, sizes, ratios, anchor_type=None))
    ref = _reference_numpy(16, 16, sizes, ratios, anchor_type=None)
    assert out.shape == ref.shape, (out.shape, ref.shape)
    np.testing.assert_allclose(np.asarray(out), ref, rtol=1e-5, atol=1e-6)

    # Also exercise the padded-row (H % g != 0) lane-dense path.
    x2 = jax.random.normal(key, (1, 3, 19, 19), dtype=jnp.float32)
    out2 = jax.block_until_ready(anchor_generator(x2, sizes, ratios, anchor_type=None))
    ref2 = _reference_numpy(19, 19, sizes, ratios, anchor_type=None)
    assert out2.shape == ref2.shape, (out2.shape, ref2.shape)
    np.testing.assert_allclose(np.asarray(out2), ref2, rtol=1e-5, atol=1e-6)

    print("KERNEL_OK")
</pallas_src>

<mosaic_0001>
module attributes {stable_mosaic.version = 11 : i64} {
  func.func @_anchor_kernel(%arg0: i32, %arg1: memref<1x640xf32, #tpu.memory_space<vmem>>, %arg2: memref<1x640xf32, #tpu.memory_space<vmem>>, %arg3: memref<8x640xf32, #tpu.memory_space<vmem>>) attributes {dimension_semantics = [#tpu.dimension_semantics<parallel>], iteration_bounds = array<i64: 1>, scalar_prefetch = 0 : i64, scratch_operands = 0 : i64, tpu.core_type = #tpu.core_type<tc>, window_params = [{pipeline_mode = #tpu.pipeline_mode<synchronous>, transform_indices = @transform_0, window_bounds = array<i64: 1, 640>}, {pipeline_mode = #tpu.pipeline_mode<synchronous>, transform_indices = @transform_1, window_bounds = array<i64: 1, 640>}, {transform_indices = @transform_2, window_bounds = array<i64: 8, 640>}]} {
    %c8_i32 = arith.constant 8 : i32
    %0 = arith.muli %arg0, %c8_i32 : i32
    %1 = tpu.iota {dimensions = array<i32: 0>} : vector<8x1xi32>
    %2 = vector.broadcast %0 : i32 to vector<8x1xi32>
    %3 = arith.addi %2, %1 : vector<8x1xi32>
    %4 = arith.sitofp %3 : vector<8x1xi32> to vector<8x1xf32>
    %c0 = arith.constant 0 : index
    %c0_0 = arith.constant 0 : index
    %5 = vector.load %arg1[%c0, %c0_0] : memref<1x640xf32, #tpu.memory_space<vmem>>, vector<1x640xf32>
    %c0_1 = arith.constant 0 : index
    %c0_2 = arith.constant 0 : index
    %6 = vector.load %arg2[%c0_1, %c0_2] : memref<1x640xf32, #tpu.memory_space<vmem>>, vector<1x640xf32>
    %7 = vector.broadcast %4 : vector<8x1xf32> to vector<8x640xf32>
    %8 = vector.broadcast %6 : vector<1x640xf32> to vector<8x640xf32>
    %9 = arith.mulf %7, %8 : vector<8x640xf32>
    %10 = vector.broadcast %5 : vector<1x640xf32> to vector<8x640xf32>
    %11 = arith.addf %10, %9 : vector<8x640xf32>
    %c0_3 = arith.constant 0 : index
    %c0_4 = arith.constant 0 : index
    %12 = vector.load %arg3[%c0_3, %c0_4] : memref<8x640xf32, #tpu.memory_space<vmem>>, vector<8x640xf32>
    tpu.vector_store %arg3[%c0_3, %c0_4], %11 {strides = array<i32>} : memref<8x640xf32, #tpu.memory_space<vmem>>, vector<8x640xf32>,
    return
  }
  func.func @transform_0(%arg0: i32) -> (i32, i32) {
    %c0_i32 = arith.constant 0 : i32
    %c0_i32_0 = arith.constant 0 : i32
    %c0_i32_1 = arith.constant 0 : i32
    return %c0_i32, %c0_i32_0 : i32, i32
  }
  func.func @transform_1(%arg0: i32) -> (i32, i32) {
    %c0_i32 = arith.constant 0 : i32
    %c0_i32_0 = arith.constant 0 : i32
    %c0_i32_1 = arith.constant 0 : i32
    return %c0_i32, %c0_i32_0 : i32, i32
  }
  func.func @transform_2(%arg0: i32) -> (i32, i32) {
    %c0_i32 = arith.constant 0 : i32
    %c0_i32_0 = arith.constant 0 : i32
    return %arg0, %c0_i32 : i32, i32
  }
}

</mosaic_0001>

<llo_original>
// kernel: tpu_custom_call.1
$region0: #{tpu_custom_call.1}
  #allocation0 [shape = 'u32[]', space=smem, size = 0x4, offset = 0x4, fixed_abs, tag = 'smem constant byte address 0x4 - core index']
  #allocation1 [shape = 'u32[144,128]{1,0:T(1,128)}', space=vmem, size = 0x12000, scoped, tag = 'internal scratch']
  %s0 = inlined_call_operand.hbm [shape: f32[1,640], index: 0, kind: input, shape index: {}]
  %s1 = inlined_call_operand.hbm [shape: f32[1,640], index: 1, kind: input, shape index: {}]
  %s2 = inlined_call_operand.hbm [shape: f32[8,640], index: 2, kind: output, shape index: {}]
  %s3 = sld [smem:[#allocation0]]
  $region26: #{tpu_custom_call.1} parent=0
    _
  %s5 = ssub.s32 1, %s3
  %s6 = scalar_select 0, %s5, %s3
  $region1: #{tpu_custom_call.1} parent=0
    #allocation2 [shape = 'u8[2560]{0}', space=vmem, size = 0xc00, scoped, tag = 'input window, operand 0, single buffered']
    #allocation3 [shape = 's32[1]{0}', space=sflag, size = 0x4, scoped, tag = 'scoped memory for tpu_custom_call.1']
    #allocation4 [shape = 's32[1]{0}', space=sflag, size = 0x4, scoped, tag = 'scoped memory for tpu_custom_call.1']
    #allocation5 [shape = 'u8[2560]{0}', space=vmem, size = 0xc00, scoped, tag = 'input window, operand 1, single buffered']
    #allocation6 [shape = 's32[1]{0}', space=sflag, size = 0x4, scoped, tag = 'scoped memory for tpu_custom_call.1']
    #allocation7 [shape = 'u8[20480]{0}', space=vmem, size = 0x5000, scoped, tag = 'output window, operand 0, single buffered']
    %7 = vsyncpa [#allocation3], 0
    %8 = vsyncpa [#allocation6], 0
    %9 = vsyncpa [#allocation4], 0
    // Predicated region
    $region2: #{tpu_custom_call.1} parent=1 // pred_check
      _
    $region3: #{tpu_custom_call.1} parent=1 // pred_check_branch
      %11 = sbr.rel (0) target = $region5
    $region4: #{tpu_custom_call.1} parent=1 // pred_region
      %s13 = ssub.s32 80, 80
      %14 = vsyncadd [#allocation3], %s13
      %s16 = sshll.u32 [#allocation2], 4
      %s17 = int_to_ptr.vmem [resolvable:$true] %s16
      %19 = dma.hbm_to_vmem [thread:$0]  %s0, 80, %s17, [#allocation3]
    $region5: #{tpu_custom_call.1} parent=1 // pred_fallthru
      _
    // Predicated region
    $region6: #{tpu_custom_call.1} parent=1 // pred_check
      _
    $region7: #{tpu_custom_call.1} parent=1 // pred_check_branch
      %21 = sbr.rel (0) target = $region9
    $region8: #{tpu_custom_call.1} parent=1 // pred_region
      %s23 = ssub.s32 80, 80
      %24 = vsyncadd [#allocation6], %s23
      %s26 = sshll.u32 [#allocation5], 4
      %s27 = int_to_ptr.vmem [resolvable:$true] %s26
      %29 = dma.hbm_to_vmem [thread:$0]  %s1, 80, %s27, [#allocation6]
    $region9: #{tpu_custom_call.1} parent=1 // pred_fallthru
      _
    // Predicated region
    $region10: #{tpu_custom_call.1} parent=1 // pred_check
      _
    $region11: #{tpu_custom_call.1} parent=1 // pred_check_branch
      %31 = sbr.rel (0) target = $region13
    $region12: #{tpu_custom_call.1} parent=1 // pred_region
      %32 = dma.done [#allocation3], 80
    $region13: #{tpu_custom_call.1} parent=1 // pred_fallthru
      _
    // Predicated region
    $region14: #{tpu_custom_call.1} parent=1 // pred_check
      _
    $region15: #{tpu_custom_call.1} parent=1 // pred_check_branch
      %34 = sbr.rel (0) target = $region17
    $region16: #{tpu_custom_call.1} parent=1 // pred_region
      %35 = dma.done [#allocation6], 80
    $region17: #{tpu_custom_call.1} parent=1 // pred_fallthru
      _
    %s36 = smul.u32 0, 8
    %v37 = vlaneseq
    %v38 = vshrl.u32 %v37, 7
    %v39 = vstv %s36
    %v40 = vadd.s32 %v39, %v38
    %v41 = vcvt.s32.f32 %v40
    %v42 = vld [vmem:[#allocation2] sm:$0x1f]
    %v43 = vld [vmem:[#allocation5] sm:$0x1f]
    %v45 = vlaneseq
    %v46 = vshrl.u32 %v45, 7
    %v47 = vsub.s32 0, %v46
    %v48 = vrot.slane %v43, %v47
    %v49 = vlaneseq
    %v50 = vshrl.u32 %v49, 7
    %v51 = vsub.s32 1, %v50
    %v52 = vrot.slane %v43, %v51
    %v53 = vlaneseq
    %v54 = vshrl.u32 %v53, 7
    %v55 = vsub.s32 2, %v54
    %v56 = vrot.slane %v43, %v55
    %v57 = vlaneseq
    %v58 = vshrl.u32 %v57, 7
    %v59 = vsub.s32 3, %v58
    %v60 = vrot.slane %v43, %v59
    %v61 = vlaneseq
    %v62 = vshrl.u32 %v61, 7
    %v63 = vsub.s32 4, %v62
    %v64 = vrot.slane %v43, %v63
    %v70 = vmul.f32 %v41, %v48
    %v71 = vmul.f32 %v41, %v52
    %v72 = vmul.f32 %v41, %v56
    %v73 = vmul.f32 %v41, %v60
    %v74 = vmul.f32 %v41, %v64
    %v76 = vlaneseq
    %v77 = vshrl.u32 %v76, 7
    %v78 = vsub.s32 0, %v77
    %v79 = vrot.slane %v42, %v78
    %v80 = vlaneseq
    %v81 = vshrl.u32 %v80, 7
    %v82 = vsub.s32 1, %v81
    %v83 = vrot.slane %v42, %v82
    %v84 = vlaneseq
    %v85 = vshrl.u32 %v84, 7
    %v86 = vsub.s32 2, %v85
    %v87 = vrot.slane %v42, %v86
    %v88 = vlaneseq
    %v89 = vshrl.u32 %v88, 7
    %v90 = vsub.s32 3, %v89
    %v91 = vrot.slane %v42, %v90
    %v92 = vlaneseq
    %v93 = vshrl.u32 %v92, 7
    %v94 = vsub.s32 4, %v93
    %v95 = vrot.slane %v42, %v94
    %v101 = vadd.f32 %v79, %v70
    %v102 = vadd.f32 %v83, %v71
    %v103 = vadd.f32 %v87, %v72
    %v104 = vadd.f32 %v91, %v73
    %v105 = vadd.f32 %v95, %v74
    %106 = vst [vmem:[#allocation7] sm:$0xff] %v101
    %107 = vst [vmem:[#allocation7 + $0x8] sm:$0xff] %v102
    %108 = vst [vmem:[#allocation7 + $0x10] sm:$0xff] %v103
    %109 = vst [vmem:[#allocation7 + $0x18] sm:$0xff] %v104
    %110 = vst [vmem:[#allocation7 + $0x20] sm:$0xff] %v105
    // Predicated region
    $region18: #{tpu_custom_call.1} parent=1 // pred_check
      _
    $region19: #{tpu_custom_call.1} parent=1 // pred_check_branch
      %112 = sbr.rel (0) target = $region21
    $region20: #{tpu_custom_call.1} parent=1 // pred_region
      %s114 = ssub.s32 640, 640
      %115 = vsyncadd [#allocation4], %s114
      %s117 = sshll.u32 [#allocation7], 4
      %s118 = int_to_ptr.vmem [resolvable:$true] %s117
      %120 = dma.vmem_to_hbm [thread:$0]  %s118, 640, %s2, [#allocation4]
    $region21: #{tpu_custom_call.1} parent=1 // pred_fallthru
      _
    // Predicated region
    $region22: #{tpu_custom_call.1} parent=1 // pred_check
      _
    $region23: #{tpu_custom_call.1} parent=1 // pred_check_branch
      %122 = sbr.rel (0) target = $region25
    $region24: #{tpu_custom_call.1} parent=1 // pred_region
      %123 = dma.done [#allocation4], 640
    $region25: #{tpu_custom_call.1} parent=1 // pred_fallthru
      _
    %124 = vsyncpa [#allocation3], 1
    %125 = vsyncpa [#allocation6], 1
    %126 = vsyncpa [#allocation4], 1

</llo_original>
